<compile_context>
chip_gen: v6e
topology: v6e:2x2x1
jax: 0.10.0
libtpu: 0.0.40
codegen_flags: <defaults>
</compile_context>

<pallas_src>
import functools

import jax
import jax.numpy as jnp
from jax.experimental import pallas as pl
from jax.experimental.pallas import tpu as pltpu


def _round_up(v, m):
    return ((v + m - 1) // m) * m


def _tubelet_matmul_kernel(x_ref, w_ref, b_ref, o_ref):
    # x_ref: (tm, K)      compute dtype (streamed row tile of patches)
    # w_ref: (K, E_pad)   compute dtype (resident across the grid)
    # b_ref: (1, E_pad)   f32           (resident across the grid)
    # o_ref: (tm, E_pad)  out dtype
    acc = jnp.dot(x_ref[...], w_ref[...], preferred_element_type=jnp.float32)
    o_ref[...] = (acc + b_ref[...]).astype(o_ref.dtype)


def _choose_row_tile(M, K, E_pad, in_bytes, out_bytes, tm_target):
    """Number of patch rows per grid step."""
    if M <= tm_target:
        # Single (or few) tile(s); bf16 wants sublane pairs -> multiple of 16.
        return _round_up(M, 16)
    # VMEM working set: double-buffered patch tile + double-buffered output
    # tile + resident weight/bias.  Stay within ~24 MiB so a 32 MiB scoped
    # limit is enough on every generation (v5e/v6e/v7x).
    budget = 24 * (1 << 20)
    resident = K * E_pad * in_bytes + E_pad * 4
    per_row = 2 * K * in_bytes + 2 * E_pad * out_bytes
    tm = min(tm_target, max(256, (budget - resident) // per_row))
    # Keep at least ~4 row tiles so the "parallel" M axis can be split
    # evenly across v7x's two TensorCores.
    tm = min(tm, max(256, _round_up(M // 4, 256)))
    return max(256, (tm // 256) * 256)


def tubelet_embed(x, weight, bias, *, early_stride, patch_size,
                  compute_dtype=jnp.bfloat16, out_dtype=None, tm_target=2048):
    """Pallas implementation of TubeletEmbed.forward.

    x:      (B, C, T, H, W)    with T == early_stride, H % ph == 0, W % pw == 0
    weight: (E, C, T, ph, pw)  Conv3d weight (kernel == stride)
    bias:   (E,)               Conv3d bias
    returns (B, num_patches, E) in `out_dtype` (default: compute_dtype).
    """
    B, C, T, H, W = x.shape
    ph, pw = patch_size
    assert T == early_stride
    assert H % ph == 0 and W % pw == 0
    nh, nw = H // ph, W // pw
    num_patches = nh * nw
    E = weight.shape[0]
    K = C * T * ph * pw
    M = B * num_patches
    out_dtype = compute_dtype if out_dtype is None else out_dtype
    in_bytes = jnp.dtype(compute_dtype).itemsize
    out_bytes = jnp.dtype(out_dtype).itemsize

    # ---- tiling decisions ---------------------------------------------------
    # Lane-dense output only when the padding overhead is modest (E >= 64);
    # for tiny E the 4x extra write bandwidth of padding outweighs the
    # masked-store penalty.  Real video-swin E (96/768/...) pads <= 1.33x.
    if E % 128 == 0 or E < 64:
        E_pad = E
    else:
        E_pad = _round_up(E, 128)
    tm = _choose_row_tile(M, K, E_pad, in_bytes, out_bytes, tm_target)
    grid = (pl.cdiv(M, tm),)

    # ---- glue: patch extraction (pure layout) --------------------------------
    # Cast to the compute dtype *before* the transpose so the materialized
    # (M, K) array costs half the HBM traffic; XLA fuses cast+transpose.
    xp = x.astype(compute_dtype).reshape(B, C, T, nh, ph, nw, pw)
    xp = jnp.transpose(xp, (0, 3, 5, 1, 2, 4, 6))   # (B, nh, nw, C, T, ph, pw)
    patches = xp.reshape(M, K)                      # no M padding (ragged ok)

    # Conv3d weight (E, C, T, ph, pw) -> GEMM weight (K, E_pad), same
    # (c, t, kh, kw) flatten order as the patches.  K is never padded.
    w_mat = weight.reshape(E, K).T.astype(compute_dtype)
    b_vec = bias.astype(jnp.float32)
    if E_pad != E:
        w_mat = jnp.pad(w_mat, ((0, 0), (0, E_pad - E)))
        b_vec = jnp.pad(b_vec, (0, E_pad - E))
    b_mat = b_vec.reshape(1, E_pad)

    cost = pl.CostEstimate(
        flops=2 * M * K * E_pad,
        transcendentals=0,
        bytes_accessed=(M * K * in_bytes + K * E_pad * in_bytes
                        + E_pad * 4 + M * E_pad * out_bytes),
    )

    out = pl.pallas_call(
        _tubelet_matmul_kernel,
        out_shape=jax.ShapeDtypeStruct((M, E_pad), out_dtype),
        grid_spec=pltpu.PrefetchScalarGridSpec(
            num_scalar_prefetch=0,
            grid=grid,
            in_specs=[
                # Row tiles of patches stream through the pipeline.
                pl.BlockSpec((tm, K), lambda i: (i, 0)),
                # Weight / bias: constant index_map -> stay resident in VMEM.
                pl.BlockSpec((K, E_pad), lambda i: (0, 0)),
                pl.BlockSpec((1, E_pad), lambda i: (0, 0)),
            ],
            out_specs=pl.BlockSpec((tm, E_pad), lambda i: (i, 0)),
        ),
        compiler_params=pltpu.CompilerParams(
            # Independent row tiles: shard across TensorCores on v7x.
            dimension_semantics=("parallel",),
            vmem_limit_bytes=32 * (1 << 20),
        ),
        cost_estimate=cost,
    )(patches, w_mat, b_mat)

    if E_pad != E:
        out = out[:, :E]
    return out.reshape(B, num_patches, E)


if __name__ == "__main__":
    # Small TubeletEmbed config (consistent with the module's constraints):
    #   img_size=16, early_stride=4, patch_size=4, in_chans=3, embed_dim=32
    img_size = 16
    early_stride = 4
    patch_size = (4, 4)
    in_chans = 3
    embed_dim = 32

    B = 2
    key = jax.random.PRNGKey(0)
    kx, kw, kb = jax.random.split(key, 3)

    x = jax.random.normal(
        kx, (B, in_chans, early_stride, img_size, img_size), dtype=jnp.float32)
    # Deterministic synthetic Conv3d parameters (shapes as in nn.Conv3d).
    weight = jax.random.normal(
        kw, (embed_dim, in_chans, early_stride, patch_size[0], patch_size[1]),
        dtype=jnp.float32) * 0.02
    bias = jax.random.normal(kb, (embed_dim,), dtype=jnp.float32) * 0.02

    fn = jax.jit(functools.partial(
        tubelet_embed, early_stride=early_stride, patch_size=patch_size))
    out = fn(x, weight, bias)
    out = jax.block_until_ready(out)

    # Reference check against a plain-JAX conv3d (kernel size == stride).
    # Kernel computes in bf16 with f32 accumulation and emits bf16 output
    # -> slightly wider tolerance.
    ref = jax.lax.conv_general_dilated(
        x, weight,
        window_strides=(early_stride, patch_size[0], patch_size[1]),
        padding="VALID",
        dimension_numbers=("NCDHW", "OIDHW", "NCDHW"),
    ) + bias[None, :, None, None, None]
    ref = ref.reshape(B, embed_dim, -1).transpose(0, 2, 1)

    num_patches = (img_size // patch_size[0]) * (img_size // patch_size[1])
    assert out.shape == (B, num_patches, embed_dim)
    assert jnp.allclose(out.astype(jnp.float32), ref, atol=2e-2, rtol=2e-2), (
        float(jnp.max(jnp.abs(out.astype(jnp.float32) - ref))))

    print("KERNEL_OK")
</pallas_src>

<mosaic_0001>
module attributes {stable_mosaic.version = 11 : i64} {
  func.func @_tubelet_matmul_kernel(%arg0: i32, %arg1: memref<32x192xbf16, #tpu.memory_space<vmem>>, %arg2: memref<192x32xbf16, #tpu.memory_space<vmem>>, %arg3: memref<1x32xf32, #tpu.memory_space<vmem>>, %arg4: memref<32x32xbf16, #tpu.memory_space<vmem>>) attributes {dimension_semantics = [#tpu.dimension_semantics<parallel>], iteration_bounds = array<i64: 1>, scalar_prefetch = 0 : i64, scratch_operands = 0 : i64, tpu.core_type = #tpu.core_type<tc>, window_params = [{transform_indices = @transform_0, window_bounds = array<i64: 32, 192>}, {pipeline_mode = #tpu.pipeline_mode<synchronous>, transform_indices = @transform_1, window_bounds = array<i64: 192, 32>}, {pipeline_mode = #tpu.pipeline_mode<synchronous>, transform_indices = @transform_2, window_bounds = array<i64: 1, 32>}, {transform_indices = @transform_3, window_bounds = array<i64: 32, 32>}]} {
    %c0 = arith.constant 0 : index
    %c0_0 = arith.constant 0 : index
    %0 = vector.load %arg1[%c0, %c0_0] : memref<32x192xbf16, #tpu.memory_space<vmem>>, vector<32x192xbf16>
    %c0_1 = arith.constant 0 : index
    %c0_2 = arith.constant 0 : index
    %1 = vector.load %arg2[%c0_1, %c0_2] : memref<192x32xbf16, #tpu.memory_space<vmem>>, vector<192x32xbf16>
    %cst = arith.constant dense<0.000000e+00> : vector<32x32xf32>
    %2 = tpu.matmul %0, %1, %cst {dimension_numbers = #tpu.dot_dimension_numbers<[1], [0], [0], [1], [0, 0, 1, 1], [], []>} : vector<32x192xbf16>, vector<192x32xbf16>, vector<32x32xf32> -> vector<32x32xf32>
    %c0_3 = arith.constant 0 : index
    %c0_4 = arith.constant 0 : index
    %3 = vector.load %arg3[%c0_3, %c0_4] : memref<1x32xf32, #tpu.memory_space<vmem>>, vector<1x32xf32>
    %4 = vector.broadcast %3 : vector<1x32xf32> to vector<32x32xf32>
    %5 = arith.addf %2, %4 : vector<32x32xf32>
    %6 = arith.truncf %5 : vector<32x32xf32> to vector<32x32xbf16>
    %c0_5 = arith.constant 0 : index
    %c0_6 = arith.constant 0 : index
    %7 = vector.load %arg4[%c0_5, %c0_6] : memref<32x32xbf16, #tpu.memory_space<vmem>>, vector<32x32xbf16>
    tpu.vector_store %arg4[%c0_5, %c0_6], %6 {strides = array<i32>} : memref<32x32xbf16, #tpu.memory_space<vmem>>, vector<32x32xbf16>,
    return
  }
  func.func @transform_0(%arg0: i32) -> (i32, i32) {
    %c0_i32 = arith.constant 0 : i32
    %c0_i32_0 = arith.constant 0 : i32
    return %arg0, %c0_i32 : i32, i32
  }
  func.func @transform_1(%arg0: i32) -> (i32, i32) {
    %c0_i32 = arith.constant 0 : i32
    %c0_i32_0 = arith.constant 0 : i32
    %c0_i32_1 = arith.constant 0 : i32
    return %c0_i32, %c0_i32_0 : i32, i32
  }
  func.func @transform_2(%arg0: i32) -> (i32, i32) {
    %c0_i32 = arith.constant 0 : i32
    %c0_i32_0 = arith.constant 0 : i32
    %c0_i32_1 = arith.constant 0 : i32
    return %c0_i32, %c0_i32_0 : i32, i32
  }
  func.func @transform_3(%arg0: i32) -> (i32, i32) {
    %c0_i32 = arith.constant 0 : i32
    %c0_i32_0 = arith.constant 0 : i32
    return %arg0, %c0_i32 : i32, i32
  }
}

</mosaic_0001>

<llo_original>
// kernel: tubelet_embed.1
$region0: #{tubelet_embed.1}
  #allocation0 [shape = 'u32[]', space=smem, size = 0x4, offset = 0x4, fixed_abs, tag = 'smem constant byte address 0x4 - core index']
  #allocation1 [shape = 'u32[144,128]{1,0:T(1,128)}', space=vmem, size = 0x12000, scoped, tag = 'internal scratch']
  %s0 = inlined_call_operand.vmem [shape: bf16[32,192], index: 0, kind: input, shape index: {}]
  %s1 = inlined_call_operand.vmem [shape: bf16[192,32], index: 1, kind: input, shape index: {}]
  %s2 = inlined_call_operand.vmem [shape: f32[1,32], index: 2, kind: input, shape index: {}]
  %s3 = inlined_call_operand.hbm [shape: bf16[32,32], index: 3, kind: output, shape index: {}]
  %s4 = sld [smem:[#allocation0]]
  $region22: #{tubelet_embed.1} parent=0
    _
  %s6 = ssub.s32 1, %s4
  %s7 = scalar_select 0, %s6, %s4
  $region1: #{tubelet_embed.1} parent=0
    #allocation2 [shape = 'u8[8192]{0}', space=vmem, size = 0x2000, scoped, tag = 'output window, operand 0, single buffered']
    #allocation3 [shape = 's32[1]{0}', space=sflag, size = 0x4, scoped, tag = 'scoped memory for tubelet_embed.1']
    %8 = vsyncpa [#allocation3], 0
    // Predicated region
    $region2: #{tubelet_embed.1} parent=1 // pred_check
      _
    $region3: #{tubelet_embed.1} parent=1 // pred_check_branch
      %10 = sbr.rel (0) target = $region5
    $region4: #{tubelet_embed.1} parent=1 // pred_region
      _
    $region5: #{tubelet_embed.1} parent=1 // pred_fallthru
      _
    // Predicated region
    $region6: #{tubelet_embed.1} parent=1 // pred_check
      _
    $region7: #{tubelet_embed.1} parent=1 // pred_check_branch
      %12 = sbr.rel (0) target = $region9
    $region8: #{tubelet_embed.1} parent=1 // pred_region
      _
    $region9: #{tubelet_embed.1} parent=1 // pred_fallthru
      _
    // Predicated region
    $region10: #{tubelet_embed.1} parent=1 // pred_check
      _
    $region11: #{tubelet_embed.1} parent=1 // pred_check_branch
      %14 = sbr.rel (0) target = $region13
    $region12: #{tubelet_embed.1} parent=1 // pred_region
      _
    $region13: #{tubelet_embed.1} parent=1 // pred_fallthru
      _
    %v16 = vld [vmem:[%s0] sm:$0xff]
    %v17 = vld [vmem:[%s0 + $0x8] sm:$0xff]
    %v18 = vld [vmem:[%s0 + $0x10] sm:$0xff]
    %v19 = vld [vmem:[%s0 + $0x18] sm:$0xff]
    %v20 = vld [vmem:[%s1] sm:$0xf]
    %v21 = vld [vmem:[%s1 + $0x4] sm:$0xf]
    %v22 = vld [vmem:[%s1 + $0x8] sm:$0xf]
    %v23 = vld [vmem:[%s1 + $0xc] sm:$0xf]
    %v24 = vld [vmem:[%s1 + $0x10] sm:$0xf]
    %v25 = vld [vmem:[%s1 + $0x14] sm:$0xf]
    %v26 = vld [vmem:[%s1 + $0x18] sm:$0xf]
    %v27 = vld [vmem:[%s1 + $0x1c] sm:$0xf]
    %v28 = vld [vmem:[%s1 + $0x20] sm:$0xf]
    %v29 = vld [vmem:[%s1 + $0x24] sm:$0xf]
    %v30 = vld [vmem:[%s1 + $0x28] sm:$0xf]
    %v31 = vld [vmem:[%s1 + $0x2c] sm:$0xf]
    %v32 = vld [vmem:[%s1 + $0x30] sm:$0xf]
    %v33 = vld [vmem:[%s1 + $0x34] sm:$0xf]
    %v34 = vld [vmem:[%s1 + $0x38] sm:$0xf]
    %v35 = vld [vmem:[%s1 + $0x3c] sm:$0xf]
    %v36 = vld [vmem:[%s1 + $0x40] sm:$0xf]
    %v37 = vld [vmem:[%s1 + $0x44] sm:$0xf]
    %v38 = vld [vmem:[%s1 + $0x48] sm:$0xf]
    %v39 = vld [vmem:[%s1 + $0x4c] sm:$0xf]
    %v40 = vld [vmem:[%s1 + $0x50] sm:$0xf]
    %v41 = vld [vmem:[%s1 + $0x54] sm:$0xf]
    %v42 = vld [vmem:[%s1 + $0x58] sm:$0xf]
    %v43 = vld [vmem:[%s1 + $0x5c] sm:$0xf]
    %v44 = vld [vmem:[%s2] sm:$0x1]
    %v46 = vlaneseq
    %v47 = vshrl.u32 %v46, 7
    %v48 = vsub.s32 0, %v47
    %v49 = vrot.slane %v44, %v48
    %v55 = vunpack.c.l.b16 %v16
    %v56 = vunpack.c.h.b16 %v16
    %v57 = vunpack.c.l.b16 %v17
    %v58 = vunpack.c.h.b16 %v17
    %v59 = vunpack.c.l.b16 %v18
    %v60 = vunpack.c.h.b16 %v18
    %v61 = vunpack.c.l.b16 %v19
    %v62 = vunpack.c.h.b16 %v19
    %v63 = vpack.c.b16 %v57, %v55
    %v64 = vpack.c.b16 %v58, %v56
    %v65 = vpack.c.b16 %v61, %v59
    %v66 = vpack.c.b16 %v62, %v60
    %v93 = vunpack.c.l.b16 %v20
    %v94 = vunpack.c.l.b16 %v21
    %v95 = vunpack.c.l.b16 %v22
    %v96 = vunpack.c.l.b16 %v23
    %v97 = vunpack.c.l.b16 %v24
    %v98 = vunpack.c.l.b16 %v25
    %v99 = vunpack.c.l.b16 %v26
    %v100 = vunpack.c.l.b16 %v27
    %v101 = vunpack.c.l.b16 %v28
    %v102 = vunpack.c.l.b16 %v29
    %v103 = vunpack.c.l.b16 %v30
    %v104 = vunpack.c.l.b16 %v31
    %v105 = vunpack.c.l.b16 %v32
    %v106 = vunpack.c.l.b16 %v33
    %v107 = vunpack.c.l.b16 %v34
    %v108 = vunpack.c.l.b16 %v35
    %v109 = vunpack.c.l.b16 %v36
    %v110 = vunpack.c.l.b16 %v37
    %v111 = vunpack.c.l.b16 %v38
    %v112 = vunpack.c.l.b16 %v39
    %v113 = vunpack.c.l.b16 %v40
    %v114 = vunpack.c.l.b16 %v41
    %v115 = vunpack.c.l.b16 %v42
    %v116 = vunpack.c.l.b16 %v43
    %v117 = vpack.c.b16 %v94, %v93
    %v118 = vpack.c.b16 %v96, %v95
    %v119 = vpack.c.b16 %v98, %v97
    %v120 = vpack.c.b16 %v100, %v99
    %v121 = vpack.c.b16 %v102, %v101
    %v122 = vpack.c.b16 %v104, %v103
    %v123 = vpack.c.b16 %v106, %v105
    %v124 = vpack.c.b16 %v108, %v107
    %v125 = vpack.c.b16 %v110, %v109
    %v126 = vpack.c.b16 %v112, %v111
    %v127 = vpack.c.b16 %v114, %v113
    %v128 = vpack.c.b16 %v116, %v115
    %vm141 = vcmask 523264
    %v143 = vsel %vm141, %v64, 0
    %v146 = vsel %vm141, %v66, 0
    %148 = vmatprep.subr.bf16.mxu0 0
    %149 = vmatpush1.bf16.msra.mxu0 %v124
    %150 = vmatprep.subr.bf16.mxu0 0
    %151 = vmatpush1.bf16.msra.mxu0 %v123
    %152 = vmatprep.subr.bf16.mxu0 0
    %153 = vmatpush1.bf16.msra.mxu0 %v122
    %154 = vmatprep.subr.bf16.mxu0 0
    %155 = vmatpush1.bf16.msra.mxu0 %v121
    %156 = vmatprep.subr.bf16.mxu0 0
    %157 = vmatpush1.bf16.msra.mxu0 %v120
    %158 = vmatprep.subr.bf16.mxu0 0
    %159 = vmatpush1.bf16.msra.mxu0 %v119
    %160 = vmatprep.subr.bf16.mxu0 0
    %161 = vmatpush1.bf16.msra.mxu0 %v118
    %162 = vmatprep.subr.bf16.mxu0 0
    %163 = vmatpush1.bf16.msra.mxu0 %v117
    %164 = vmatprep.subr.bf16.mxu0 0
    %165 = vmatpush2.bf16.msra.mxu0 0
    %166 = vmatprep.subr.bf16.mxu0 0
    %167 = vmatpush2.bf16.msra.mxu0 0
    %168 = vmatprep.subr.bf16.mxu0 0
    %169 = vmatpush2.bf16.msra.mxu0 0
    %170 = vmatprep.subr.bf16.mxu0 0
    %171 = vmatpush2.bf16.msra.mxu0 0
    %172 = vmatprep.subr.bf16.mxu0 0
    %173 = vmatpush2.bf16.msra.mxu0 %v128
    %174 = vmatprep.subr.bf16.mxu0 0
    %175 = vmatpush2.bf16.msra.mxu0 %v127
    %176 = vmatprep.subr.bf16.mxu0 0
    %177 = vmatpush2.bf16.msra.mxu0 %v126
    %178 = vmatprep.subr.bf16.mxu0 0
    %179 = vmatpush2.bf16.msra.mxu0 %v125
    %180 = vmatprep.mubr.bf16.mxu0 %v143
    %181 = vmatmul.mubr.bf16.gmra.mxu0 %v63
    %v182 = vpop.f32.mrf.mxu0
    %v183 = vadd.f32 %v49, %v182
    %v184 = vpop.f32.mrf.mxu0
    %v185 = vpop.f32.mrf.mxu0
    %v186 = vadd.f32 %v49, %v185
    %v187 = vpop.f32.mrf.mxu0
    %188 = vmatprep.mubr.bf16.mxu0 %v146
    %189 = vmatmul.mubr.bf16.gmra.mxu0 %v65
    %v190 = vpop.f32.mrf.mxu0
    %v191 = vadd.f32 %v49, %v190
    %v192 = vpop.f32.mrf.mxu0
    %v193 = vpop.f32.mrf.mxu0
    %v194 = vadd.f32 %v49, %v193
    %v195 = vpop.f32.mrf.mxu0
    %196 = vdwg.mxu0
    %v197 = vpack.c.bf16 %v186, %v183
    %v198 = vpack.c.bf16 %v194, %v191
    %v201 = vunpack.c.l.b16 %v197
    %v202 = vunpack.c.h.b16 %v197
    %v203 = vunpack.c.l.b16 %v198
    %v204 = vunpack.c.h.b16 %v198
    %v205 = vpack.c.b16 %v201, %v201
    %v206 = vpack.c.b16 %v202, %v202
    %v207 = vpack.c.b16 %v203, %v203
    %v208 = vpack.c.b16 %v204, %v204
    %vm213 = vcmask 257024
    %214 = vst.msk [vmem:[#allocation2] sm:$0xf] %vm213, %v205
    %215 = vst.msk [vmem:[#allocation2 + $0x4] sm:$0xf] %vm213, %v206
    %216 = vst.msk [vmem:[#allocation2 + $0x8] sm:$0xf] %vm213, %v207
    %217 = vst.msk [vmem:[#allocation2 + $0xc] sm:$0xf] %vm213, %v208
    // Predicated region
    $region14: #{tubelet_embed.1} parent=1 // pred_check
      _
    $region15: #{tubelet_embed.1} parent=1 // pred_check_branch
      %219 = sbr.rel (0) target = $region17
    $region16: #{tubelet_embed.1} parent=1 // pred_region
      %s221 = ssub.s32 256, 256
      %222 = vsyncadd [#allocation3], %s221
      %s223 = sshll.u32 [#allocation2], 4
      %s224 = int_to_ptr.vmem [resolvable:$true] %s223
      %229 = dma.vmem_to_hbm [thread:$0]  %s224, 256, %s3, [#allocation3], 64, 64, 4
    $region17: #{tubelet_embed.1} parent=1 // pred_fallthru
      _
    // Predicated region
    $region18: #{tubelet_embed.1} parent=1 // pred_check
      _
    $region19: #{tubelet_embed.1} parent=1 // pred_check_branch
      %231 = sbr.rel (0) target = $region21
    $region20: #{tubelet_embed.1} parent=1 // pred_region
      %232 = dma.done [#allocation3], 256
    $region21: #{tubelet_embed.1} parent=1 // pred_fallthru
      _
    %233 = vsyncpa [#allocation3], 1

</llo_original>
